<compile_context>
chip_gen: v7x
topology: tpu7x:2x2x1
jax: 0.10.0
libtpu: 0.0.40
codegen_flags: <defaults>
</compile_context>

<pallas_src>
import functools
import math

import jax
import jax.numpy as jnp
from jax import lax
from jax.experimental import pallas as pl
from jax.experimental.pallas import tpu as pltpu


_K_SINGLE_STEP_MAX = 2048   # collapse the K reduction to one grid step up to this (padded) size


def _round_up(x, m):
    return ((x + m - 1) // m) * m


def _pick_tile(padded_dim, unit, cap):
    """Largest multiple of `unit` that divides `padded_dim` and is <= cap."""
    n = padded_dim // unit
    best = 1
    for d in range(1, n + 1):
        if n % d == 0 and d * unit <= cap:
            best = d
    return best * unit


def _dot_xwt(x, w, compute_dtype):
    # x: (tm, tk); w: (tn, tk) in native nn.Linear (out, in) layout.
    # Contract the shared K dim of both operands (== pl.dot(x, w, trans_b=True)):
    # native transposed-RHS MXU matmul with f32 accumulation.
    if compute_dtype is not None:
        x = x.astype(compute_dtype)
        w = w.astype(compute_dtype)
    return lax.dot_general(
        x, w,
        dimension_numbers=(((1,), (1,)), ((), ())),
        preferred_element_type=jnp.float32,
    )


def _kernel_single_k(x_ref, w_ref, b_ref, o_ref, *, compute_dtype):
    """Whole K reduction in one grid step: no accumulator state at all."""
    acc = _dot_xwt(x_ref[...], w_ref[...], compute_dtype)
    o_ref[...] = (acc + b_ref[...].astype(jnp.float32)).astype(o_ref.dtype)


def _kernel_multi_k_f32(x_ref, w_ref, b_ref, o_ref, *, compute_dtype):
    """K tiled; the f32 output block doubles as the accumulator (resident over k)."""
    k = pl.program_id(2)
    part = _dot_xwt(x_ref[...], w_ref[...], compute_dtype)

    @pl.when(k == 0)
    def _init():
        o_ref[...] = part

    @pl.when(k > 0)
    def _accum():
        o_ref[...] += part

    @pl.when(k == pl.num_programs(2) - 1)
    def _epilogue():
        o_ref[...] += b_ref[...].astype(jnp.float32)   # bias added once, epilogue only


def _kernel_multi_k_acc(x_ref, w_ref, b_ref, o_ref, acc_ref, *, compute_dtype):
    """K tiled with a VMEM f32 scratch accumulator (non-f32 output dtypes)."""
    k = pl.program_id(2)

    @pl.when(k == 0)
    def _init():
        acc_ref[...] = jnp.zeros_like(acc_ref)

    acc_ref[...] += _dot_xwt(x_ref[...], w_ref[...], compute_dtype)

    @pl.when(k == pl.num_programs(2) - 1)
    def _epilogue():
        o_ref[...] = (acc_ref[...] + b_ref[...].astype(jnp.float32)).astype(o_ref.dtype)


@functools.partial(jax.jit,
                   static_argnames=("tm_cap", "tn_cap", "tk_cap", "compute_dtype"))
def bound_module_forward(x, weight, bias, *, tm_cap=512, tn_cap=512, tk_cap=512,
                         compute_dtype=None):
    """Pallas implementation of BoundModule.forward == wrapped nn.Linear forward.

    x:      (B, K)   activations (batch, in_features)
    weight: (N, K)   native PyTorch nn.Linear layout (out_features, in_features)
    bias:   (N,)
    returns (B, N) == x @ weight.T + bias
    """
    B, K = x.shape
    N, K2 = weight.shape
    assert K == K2 and bias.shape == (N,)
    out_dtype = x.dtype

    # (8, 128)-rounded logical extents.  Ragged M/N edges are handled by Pallas'
    # masked partial blocks (garbage they read only lands in discarded output
    # rows/cols); only the K tail is physically zero-padded, because garbage
    # there would corrupt the reduction for *valid* outputs.
    Mp = _round_up(B, 8)
    Np = _round_up(N, 128)
    Kp = _round_up(K, 128)
    if Kp != K:
        x = jnp.pad(x, ((0, 0), (0, Kp - K)))
        weight = jnp.pad(weight, ((0, 0), (0, Kp - K)))

    tm = _pick_tile(Mp, 8, tm_cap)
    tn = _pick_tile(Np, 128, tn_cap)
    tk = Kp if Kp <= _K_SINGLE_STEP_MAX else _pick_tile(Kp, 128, tk_cap)

    # v7x megacore: keep >= 2 blocks on the parallel (M, N) grid when possible.
    if (Mp // tm) * (Np // tn) < 2:
        if Mp // 8 >= 2:
            tm = _pick_tile(Mp, 8, max(8, tm // 2))      # split M first: keeps lane-dense N tiles
        elif Np // 128 >= 2:
            tn = _pick_tile(Np, 128, max(128, tn // 2))

    gm, gn, gk = Mp // tm, Np // tn, Kp // tk
    bias2d = bias.reshape(1, N)

    if gk == 1:
        grid = (gm, gn)
        in_specs = [
            pl.BlockSpec((tm, tk), lambda i, j: (i, 0)),   # activations
            pl.BlockSpec((tn, tk), lambda i, j: (j, 0)),   # weight, native (N, K) layout
            pl.BlockSpec((1, tn), lambda i, j: (0, j)),    # bias
        ]
        out_specs = pl.BlockSpec((tm, tn), lambda i, j: (i, j))
        kernel = functools.partial(_kernel_single_k, compute_dtype=compute_dtype)
        scratch_shapes = ()
        semantics = ("parallel", "parallel")
    else:
        grid = (gm, gn, gk)
        in_specs = [
            pl.BlockSpec((tm, tk), lambda i, j, k: (i, k)),
            pl.BlockSpec((tn, tk), lambda i, j, k: (j, k)),
            pl.BlockSpec((1, tn), lambda i, j, k: (0, j)),
        ]
        out_specs = pl.BlockSpec((tm, tn), lambda i, j, k: (i, j))
        if out_dtype == jnp.float32:
            kernel = functools.partial(_kernel_multi_k_f32, compute_dtype=compute_dtype)
            scratch_shapes = ()
        else:
            kernel = functools.partial(_kernel_multi_k_acc, compute_dtype=compute_dtype)
            scratch_shapes = (pltpu.VMEM((tm, tn), jnp.float32),)
        semantics = ("parallel", "parallel", "arbitrary")

    # VMEM budget: double-buffered x / w / bias / out blocks (+ scratch if any), 2x headroom.
    in_b = jnp.dtype(x.dtype).itemsize
    out_b = jnp.dtype(out_dtype).itemsize
    b_b = jnp.dtype(bias.dtype).itemsize
    buf_bytes = (2 * in_b * (tm * tk + tn * tk) + 2 * b_b * tn + 2 * out_b * tm * tn)
    if scratch_shapes:
        buf_bytes += 4 * tm * tn
    vmem_limit = int(min(max(2 * buf_bytes, 16 * 2**20), 48 * 2**20))

    cost = pl.CostEstimate(
        flops=2 * B * K * N,
        transcendentals=0,
        bytes_accessed=in_b * (B * K + N * K) + out_b * B * N + b_b * N,
    )

    return pl.pallas_call(
        kernel,
        out_shape=jax.ShapeDtypeStruct((B, N), out_dtype),
        grid_spec=pltpu.PrefetchScalarGridSpec(
            num_scalar_prefetch=0,
            grid=grid,
            in_specs=in_specs,
            out_specs=out_specs,
            scratch_shapes=scratch_shapes,
        ),
        compiler_params=pltpu.CompilerParams(
            dimension_semantics=semantics,
            vmem_limit_bytes=vmem_limit,
        ),
        cost_estimate=cost,
    )(x, weight, bias2d)


if __name__ == "__main__":
    key = jax.random.PRNGKey(0)

    def _make_case(k, B, IN, OUT):
        kx, kw, kb = jax.random.split(k, 3)
        bound = 1.0 / math.sqrt(IN)   # PyTorch nn.Linear default init bound
        x = jax.random.normal(kx, (B, IN), dtype=jnp.float32)
        w = jax.random.uniform(kw, (OUT, IN), dtype=jnp.float32, minval=-bound, maxval=bound)
        b = jax.random.uniform(kb, (OUT,), dtype=jnp.float32, minval=-bound, maxval=bound)
        return x, w, b

    def _ref(x, w, b):
        return jnp.dot(x, w.T, precision=lax.Precision.HIGHEST) + b

    k1, k2, k3 = jax.random.split(key, 3)

    # Case 1: K collapses to a single grid step; N=384 tiles exactly (no over-padding);
    # M is split so the parallel grid has >= 2 blocks (v7x megacore).
    x1, w1, b1 = _make_case(k1, 256, 512, 384)
    y1 = jax.block_until_ready(bound_module_forward(x1, w1, b1))
    r1 = _ref(x1, w1, b1)
    assert jnp.allclose(y1, r1, atol=2e-4, rtol=2e-4), float(jnp.max(jnp.abs(y1 - r1)))

    # Case 2: small, non-(8,128)-aligned shape: K tail zero-padded, ragged N handled by a
    # masked partial output block (no wrapper-side pad of W's N dim, no output slice).
    x2, w2, b2 = _make_case(k2, 8, 48, 40)
    y2 = jax.block_until_ready(bound_module_forward(x2, w2, b2))
    r2 = _ref(x2, w2, b2)
    assert jnp.allclose(y2, r2, atol=2e-4, rtol=2e-4), float(jnp.max(jnp.abs(y2 - r2)))

    # Case 3: K large enough to need multiple grid steps -> direct accumulation into the
    # resident f32 output block (no VMEM scratch accumulator).
    x3, w3, b3 = _make_case(k3, 64, 2560, 256)
    y3 = jax.block_until_ready(bound_module_forward(x3, w3, b3))
    r3 = _ref(x3, w3, b3)
    assert jnp.allclose(y3, r3, atol=1e-3, rtol=1e-3), float(jnp.max(jnp.abs(y3 - r3)))

    # Case 4: optional bf16 MXU path (f32 accumulation); looser tolerance by construction.
    y1b = jax.block_until_ready(bound_module_forward(x1, w1, b1, compute_dtype=jnp.bfloat16))
    assert jnp.allclose(y1b, r1, atol=1e-1, rtol=1e-1), float(jnp.max(jnp.abs(y1b - r1)))

    # TODO(synk): crown_backward / ibp_forward / alpha-CROWN bound-propagation paths are
    # abstract in BoundModule (no concrete semantics to translate); only forward() is implemented.
    print("KERNEL_OK")
</pallas_src>

<mosaic_0001>
module attributes {stable_mosaic.version = 11 : i64} {
  func.func @_kernel_single_k(%arg0: i32, %arg1: i32, %arg2: memref<128x512xf32, #tpu.memory_space<vmem>>, %arg3: memref<384x512xf32, #tpu.memory_space<vmem>>, %arg4: memref<1x384xf32, #tpu.memory_space<vmem>>, %arg5: memref<128x384xf32, #tpu.memory_space<vmem>>) attributes {dimension_semantics = [#tpu.dimension_semantics<parallel>, #tpu.dimension_semantics<parallel>], iteration_bounds = array<i64: 2, 1>, scalar_prefetch = 0 : i64, scratch_operands = 0 : i64, tpu.core_type = #tpu.core_type<tc>, window_params = [{transform_indices = @transform_0, window_bounds = array<i64: 128, 512>}, {transform_indices = @transform_1, window_bounds = array<i64: 384, 512>}, {transform_indices = @transform_2, window_bounds = array<i64: 1, 384>}, {transform_indices = @transform_3, window_bounds = array<i64: 128, 384>}]} {
    %c0 = arith.constant 0 : index
    %c0_0 = arith.constant 0 : index
    %0 = vector.load %arg2[%c0, %c0_0] : memref<128x512xf32, #tpu.memory_space<vmem>>, vector<128x512xf32>
    %c0_1 = arith.constant 0 : index
    %c0_2 = arith.constant 0 : index
    %1 = vector.load %arg3[%c0_1, %c0_2] : memref<384x512xf32, #tpu.memory_space<vmem>>, vector<384x512xf32>
    %cst = arith.constant dense<0.000000e+00> : vector<128x384xf32>
    %2 = tpu.matmul %0, %1, %cst {dimension_numbers = #tpu.dot_dimension_numbers<[1], [1], [0], [0], [0, 0, 1, 0], [], []>} : vector<128x512xf32>, vector<384x512xf32>, vector<128x384xf32> -> vector<128x384xf32>
    %c0_3 = arith.constant 0 : index
    %c0_4 = arith.constant 0 : index
    %3 = vector.load %arg4[%c0_3, %c0_4] : memref<1x384xf32, #tpu.memory_space<vmem>>, vector<1x384xf32>
    %4 = vector.broadcast %3 : vector<1x384xf32> to vector<128x384xf32>
    %5 = arith.addf %2, %4 : vector<128x384xf32>
    %c0_5 = arith.constant 0 : index
    %c0_6 = arith.constant 0 : index
    %6 = vector.load %arg5[%c0_5, %c0_6] : memref<128x384xf32, #tpu.memory_space<vmem>>, vector<128x384xf32>
    tpu.vector_store %arg5[%c0_5, %c0_6], %5 {strides = array<i32>} : memref<128x384xf32, #tpu.memory_space<vmem>>, vector<128x384xf32>,
    return
  }
  func.func @transform_0(%arg0: i32, %arg1: i32) -> (i32, i32) {
    %c0_i32 = arith.constant 0 : i32
    %c0_i32_0 = arith.constant 0 : i32
    return %arg0, %c0_i32 : i32, i32
  }
  func.func @transform_1(%arg0: i32, %arg1: i32) -> (i32, i32) {
    %c0_i32 = arith.constant 0 : i32
    %c0_i32_0 = arith.constant 0 : i32
    return %arg1, %c0_i32 : i32, i32
  }
  func.func @transform_2(%arg0: i32, %arg1: i32) -> (i32, i32) {
    %c0_i32 = arith.constant 0 : i32
    %c0_i32_0 = arith.constant 0 : i32
    return %c0_i32, %arg1 : i32, i32
  }
  func.func @transform_3(%arg0: i32, %arg1: i32) -> (i32, i32) {
    %c0_i32 = arith.constant 0 : i32
    return %arg0, %arg1 : i32, i32
  }
}

</mosaic_0001>

<llo_original>
// kernel: bound_module_forward.1
$region0: #{bound_module_forward.1}
  #allocation0 [shape = 'u32[]', space=smem, size = 0x4, offset = 0x4, fixed_abs, tag = 'smem constant byte address 0x4 - core index']
  #allocation1 [shape = 'u32[144,128]{1,0:T(1,128)}', space=vmem, size = 0x12000, scoped, tag = 'internal scratch']
  %s0 = inlined_call_operand.hbm [shape: f32[256,512], index: 0, kind: input, shape index: {}]
  %s1 = inlined_call_operand.hbm [shape: f32[384,512], index: 1, kind: input, shape index: {}]
  %s2 = inlined_call_operand.vmem [shape: f32[1,384], index: 2, kind: input, shape index: {}]
  %s3 = inlined_call_operand.hbm [shape: f32[256,384], index: 3, kind: output, shape index: {}]
  %s4 = sld [smem:[#allocation0]]
  $region53: #{bound_module_forward.1} parent=0
    _
  %s6 = ssub.s32 1, %s4
  %s7 = scalar_select 0, %s6, %s4
  $region1: #{bound_module_forward.1} parent=0
    #allocation2 [shape = 'u8[524288]{0}', space=vmem, size = 0x80000, scoped, tag = 'input window, operand 0']
    #allocation3 [shape = 's32[2]{0}', space=sflag, size = 0x8, scoped, tag = 'scoped memory for bound_module_forward.1']
    #allocation4 [shape = 's32[2]{0}', space=sflag, size = 0x8, scoped, tag = 'scoped memory for bound_module_forward.1']
    #allocation5 [shape = 'u8[786432]{0}', space=vmem, size = 0xc0000, scoped, tag = 'input window, operand 1, single buffered']
    #allocation6 [shape = 's32[1]{0}', space=sflag, size = 0x4, scoped, tag = 'scoped memory for bound_module_forward.1']
    #allocation7 [shape = 'u8[393216]{0}', space=vmem, size = 0x60000, scoped, tag = 'output window, operand 0']
    %8 = vsyncpa [#allocation3], 0
    %s9 = scalar_lea.sflag [#allocation3], 1
    %10 = vsyncpa %s9, 0
    %11 = vsyncpa [#allocation6], 0
    %12 = vsyncpa [#allocation4], 0
    %s13 = scalar_lea.sflag [#allocation4], 1
    %14 = vsyncpa %s13, 0
    loop: start=0, step=1, limit=4
    $region2: #{bound_module_forward.1} parent=1 // loop_pre_header
      _
    $region3: #{bound_module_forward.1} parent=1 // loop_header
      %s16 = sphi 0, %s20
      %p17 = scmp.ge.s32.totalorder %s16, 4
      %s23 = sphi 0, %s35
      %s24 = sphi 0, %s31
      %s25 = sphi 0, %s23
      %s26 = sphi 0, %s24
      %s27 = sphi 0, %s25
      %s28 = sphi 0, %s26
      %s38 = sphi 0, %s40
      %s41 = sphi 0, %s38
      %s42 = sphi 0, %s41
      %s58 = sphi 0, %s42
      %s64 = sphi 0, %s66
      %s67 = sphi 0, %s64
      %s68 = sphi 0, %s67
      %s84 = sphi 0, %s68
      %s90 = sphi 0, %s92
      %s93 = sphi 0, %s90
      %s94 = sphi 0, %s93
      %s110 = sphi 0, %s94
      %s118 = sphi 0, %s120
      %s121 = sphi 0, %s118
      %s122 = sphi 0, %s121
      %s138 = sphi 0, %s122
    $region4: #{bound_module_forward.1} parent=1 // loop_header_branch
      %19 = sbr.rel (%p17) target = $region8
    $region5: #{bound_module_forward.1} parent=1 // loop_body
      %s21 = ssub.s32 %s16, 1
      %s22 = ssub.s32 %s16, 2
      %s29 = sadd.s32 1, %s24
      %p30 = scmp.ge.s32.totalorder %s29, 1
      %s31 = scalar_select %p30, 0, %s29
      %s32 = sadd.s32 1, %s23
      %s33 = scalar_select %p30, %s32, %s23
      %p34 = scmp.ge.s32.totalorder %s33, 2
      %s35 = scalar_select %p34, 0, %s33
      %s36 = ssub.s32 %s23, %s35
      %p37 = scmp.eq.s32.totalorder %s36, 0
      %s39 = sadd.s32 %s38, 1
      %s40 = scalar_select %p37, %s38, %s39
      %p43 = pneg %p37
      %p44 = scmp.eq.s32.totalorder %s16, 1
      %p45 = por %p43, %p44
      %p46 = scmp.ne.s32.totalorder %s38, %s41
      %p47 = scmp.eq.s32.totalorder %s16, 0
      %p48 = por %p46, %p47
      %p49 = scmp.ne.s32.totalorder %s38, %s41
      %p50 = scmp.eq.s32.totalorder %s21, 1
      %p51 = por %p49, %p50
      %p52 = scmp.ne.s32.totalorder %s41, %s42
      %p53 = scmp.eq.s32.totalorder %s21, 0
      %p54 = por %p52, %p53
      %p55 = scmp.ne.s32.totalorder %s41, %s42
      %p56 = scmp.eq.s32.totalorder %s22, 1
      %p57 = por %p55, %p56
      %p59 = scmp.ne.s32.totalorder %s42, %s58
      %p60 = scmp.eq.s32.totalorder %s22, 0
      %p61 = por %p59, %p60
      %s62 = ssub.s32 %s24, %s31
      %p63 = scmp.eq.s32.totalorder %s62, 0
      %s65 = sadd.s32 %s64, 1
      %s66 = scalar_select %p63, %s64, %s65
      %p69 = pneg %p63
      %p70 = scmp.eq.s32.totalorder %s16, 1
      %p71 = por %p69, %p70
      %p72 = scmp.ne.s32.totalorder %s64, %s67
      %p73 = scmp.eq.s32.totalorder %s16, 0
      %p74 = por %p72, %p73
      %p75 = scmp.ne.s32.totalorder %s64, %s67
      %p76 = scmp.eq.s32.totalorder %s21, 1
      %p77 = por %p75, %p76
      %p78 = scmp.ne.s32.totalorder %s67, %s68
      %p79 = scmp.eq.s32.totalorder %s21, 0
      %p80 = por %p78, %p79
      %p81 = scmp.ne.s32.totalorder %s67, %s68
      %p82 = scmp.eq.s32.totalorder %s22, 1
      %p83 = por %p81, %p82
      %p85 = scmp.ne.s32.totalorder %s68, %s84
      %p86 = scmp.eq.s32.totalorder %s22, 0
      %p87 = por %p85, %p86
      %s88 = ssub.s32 %s24, %s31
      %p89 = scmp.eq.s32.totalorder %s88, 0
      %s91 = sadd.s32 %s90, 1
      %s92 = scalar_select %p89, %s90, %s91
      %p95 = pneg %p89
      %p96 = scmp.eq.s32.totalorder %s16, 1
      %p97 = por %p95, %p96
      %p98 = scmp.ne.s32.totalorder %s90, %s93
      %p99 = scmp.eq.s32.totalorder %s16, 0
      %p100 = por %p98, %p99
      %p101 = scmp.ne.s32.totalorder %s90, %s93
      %p102 = scmp.eq.s32.totalorder %s21, 1
      %p103 = por %p101, %p102
      %p104 = scmp.ne.s32.totalorder %s93, %s94
      %p105 = scmp.eq.s32.totalorder %s21, 0
      %p106 = por %p104, %p105
      %p107 = scmp.ne.s32.totalorder %s93, %s94
      %p108 = scmp.eq.s32.totalorder %s22, 1
      %p109 = por %p107, %p108
      %p111 = scmp.ne.s32.totalorder %s94, %s110
      %p112 = scmp.eq.s32.totalorder %s22, 0
      %p113 = por %p111, %p112
      %s114 = ssub.s32 %s23, %s35
      %s115 = ssub.s32 %s24, %s31
      %s116 = sor.u32 %s114, %s115
      %p117 = scmp.eq.s32.totalorder %s116, 0
      %s119 = sadd.s32 %s118, 1
      %s120 = scalar_select %p117, %s118, %s119
      %p123 = pneg %p117
      %p124 = scmp.eq.s32.totalorder %s16, 1
      %p125 = por %p123, %p124
      %p126 = scmp.ne.s32.totalorder %s118, %s121
      %p127 = scmp.eq.s32.totalorder %s16, 0
      %p128 = por %p126, %p127
      %p129 = scmp.ne.s32.totalorder %s118, %s121
      %p130 = scmp.eq.s32.totalorder %s21, 1
      %p131 = por %p129, %p130
      %p132 = scmp.ne.s32.totalorder %s121, %s122
      %p133 = scmp.eq.s32.totalorder %s21, 0
      %p134 = por %p132, %p133
      %p135 = scmp.ne.s32.totalorder %s121, %s122
      %p136 = scmp.eq.s32.totalorder %s22, 1
      %p137 = por %p135, %p136
      %p139 = scmp.ne.s32.totalorder %s122, %s138
      %p140 = scmp.eq.s32.totalorder %s22, 0
      %p141 = por %p139, %p140
      %p142 = scmp.le.s32.totalorder 1, %s16
      %p143 = scmp.lt.s32.totalorder %s16, 3
      %p144 = pnand %p142, %p143
      %p145 = pneg %p144
      // Predicated region
      $region9: #{bound_module_forward.1} parent=5 // pred_check
        _
      $region10: #{bound_module_forward.1} parent=5 // pred_check_branch
        %147 = sbr.rel (%p144) target = $region12
      $region11: #{bound_module_forward.1} parent=5 // pred_region
        %s148 = ssub.s32 %s16, 1
        // Predicated region
        $region13: #{bound_module_forward.1} parent=11 // pred_check
          %p149 = pneg %p80
        $region14: #{bound_module_forward.1} parent=11 // pred_check_branch
          %151 = sbr.rel (%p149) target = $region16
        $region15: #{bound_module_forward.1} parent=11 // pred_region
          %s152 = smul.u32 48, %s26
          %s154 = ssub.s32 24576, 24576
          %155 = vsyncadd [#allocation6], %s154
          %s156 = smul.addr %s152, 4
          %s157 = smul.addr %s156, 128
          %s158 = scalar_lea.hbm %s1, %s157
          %s159 = sshll.u32 [#allocation5], 4
          %s160 = int_to_ptr.vmem [resolvable:$true] %s159
          %165 = dma.hbm_to_vmem [thread:$0]  %s158, 24576, %s160, [#allocation6], 512, 512, 32
        $region16: #{bound_module_forward.1} parent=11 // pred_fallthru
          _
        // Predicated region
        $region17: #{bound_module_forward.1} parent=11 // pred_check
          %p166 = pneg %p106
        $region18: #{bound_module_forward.1} parent=11 // pred_check_branch
          %168 = sbr.rel (%p166) target = $region20
        $region19: #{bound_module_forward.1} parent=11 // pred_region
          %s169 = smul.u32 3, %s26
          %p170 = scmp.lt.s32.totalorder %s169, 2
          %s171 = scalar_select %p170, %s169, 2
          %s172 = scalar_lea.vmem %s2, %s171
          %s173 = smul.u32 3, %s26
        $region20: #{bound_module_forward.1} parent=11 // pred_fallthru
          _
      $region12: #{bound_module_forward.1} parent=5 // pred_fallthru
        _
      %p174 = scmp.lt.s32.totalorder %s16, 2
      // Predicated region
      $region21: #{bound_module_forward.1} parent=5 // pred_check
        %p175 = pneg %p174
      $region22: #{bound_module_forward.1} parent=5 // pred_check_branch
        %177 = sbr.rel (%p175) target = $region24
      $region23: #{bound_module_forward.1} parent=5 // pred_region
        // Predicated region
        $region25: #{bound_module_forward.1} parent=23 // pred_check
          %p178 = pneg %p48
        $region26: #{bound_module_forward.1} parent=23 // pred_check_branch
          %180 = sbr.rel (%p178) target = $region28
        $region27: #{bound_module_forward.1} parent=23 // pred_region
          %s181 = sand.u32 %s38, 1
          %s182 = scalar_lea.sflag [#allocation3], %s181
          %s183 = sand.u32 %s38, 1
          %s184 = smul.addr %s183, 512
          %s185 = scalar_lea.vmem [#allocation2], %s184
          %s186 = smul.u32 16, %s23
          %s188 = ssub.s32 8192, 8192
          %189 = vsyncadd %s182, %s188
          %s190 = smul.addr %s186, 4
          %s191 = smul.addr %s190, 128
          %s192 = scalar_lea.hbm %s0, %s191
          %s193 = sshll.u32 %s185, 4
          %s194 = int_to_ptr.vmem [resolvable:$true] %s193
          %199 = dma.hbm_to_vmem [thread:$0]  %s192, 8192, %s194, %s182, 512, 512, 32
        $region28: #{bound_module_forward.1} parent=23 // pred_fallthru
          _
      $region24: #{bound_module_forward.1} parent=5 // pred_fallthru
        _
      %p200 = scmp.le.s32.totalorder 1, %s16
      %p201 = scmp.lt.s32.totalorder %s16, 3
      %p202 = pnand %p200, %p201
      %p203 = pneg %p202
      // Predicated region
      $region29: #{bound_module_forward.1} parent=5 // pred_check
        _
      $region30: #{bound_module_forward.1} parent=5 // pred_check_branch
        %205 = sbr.rel (%p202) target = $region32
      $region31: #{bound_module_forward.1} parent=5 // pred_region
        %s206 = ssub.s32 %s16, 1
        %s207 = sand.u32 %s41, 1
        %s208 = scalar_lea.sflag [#allocation3], %s207
        %s209 = sand.u32 %s41, 1
        %s210 = smul.addr %s209, 512
        %s211 = scalar_lea.vmem [#allocation2], %s210
        // Predicated region
        $region33: #{bound_module_forward.1} parent=31 // pred_check
          %p212 = pneg %p54
        $region34: #{bound_module_forward.1} parent=31 // pred_check_branch
          %214 = sbr.rel (%p212) target = $region36
        $region35: #{bound_module_forward.1} parent=31 // pred_region
          %215 = dma.done %s208, 8192
        $region36: #{bound_module_forward.1} parent=31 // pred_fallthru
          _
        // Predicated region
        $region37: #{bound_module_forward.1} parent=31 // pred_check
          %p216 = pneg %p80
        $region38: #{bound_module_forward.1} parent=31 // pred_check_branch
          %218 = sbr.rel (%p216) target = $region40
        $region39: #{bound_module_forward.1} parent=31 // pred_region
          %219 = dma.done [#allocation6], 24576
        $region40: #{bound_module_forward.1} parent=31 // pred_fallthru
          _
        %s220 = sand.u32 %s41, 1
        %s221 = scalar_lea.sflag [#allocation3], %s220
        %s222 = sand.u32 %s41, 1
        %s223 = smul.addr %s222, 512
        %s224 = scalar_lea.vmem [#allocation2], %s223
        %p225 = pneg %p54
        %p226 = pneg %p51
        %p227 = pneg %p80
        %p228 = pneg %p77
        %s229 = smul.u32 3, %s26
        %p230 = scmp.lt.s32.totalorder %s229, 2
        %s231 = scalar_select %p230, %s229, 2
        %s232 = scalar_lea.vmem %s2, %s231
        %p233 = pneg %p106
        %p234 = pneg %p103
        %p235 = pneg %p134
        %p236 = pneg %p131
        %s237 = sand.u32 %s121, 1
        %s238 = scalar_lea.sflag [#allocation4], %s237
        %s239 = sand.u32 %s121, 1
        %s240 = smul.addr %s239, 384
        %s241 = scalar_lea.vmem [#allocation7], %s240
        %s242 = smul.u32 16, %s25
        %s243 = smul.u32 48, %s26
        %s244 = smul.u32 3, %s26
        %p245 = scmp.lt.s32.totalorder %s244, 2
        %s246 = scalar_select %p245, %s244, 2
        %s247 = scalar_lea.vmem %s2, %s246
        %s248 = smul.u32 3, %s26
        %s249 = smul.u32 16, %s25
        %s250 = smul.u32 3, %s26
        %v251 = vld [vmem:[%s211] sm:$0xff]
        %v252 = vld [vmem:[%s211 + $0x8] sm:$0xff]
        %v253 = vld [vmem:[%s211 + $0x10] sm:$0xff]
        %v254 = vld [vmem:[%s211 + $0x18] sm:$0xff]
        %v255 = vld [vmem:[%s211 + $0x20] sm:$0xff]
        %v256 = vld [vmem:[%s211 + $0x28] sm:$0xff]
        %v257 = vld [vmem:[%s211 + $0x30] sm:$0xff]
        %v258 = vld [vmem:[%s211 + $0x38] sm:$0xff]
        %v259 = vld [vmem:[%s211 + $0x40] sm:$0xff]
        %v260 = vld [vmem:[%s211 + $0x48] sm:$0xff]
        %v261 = vld [vmem:[%s211 + $0x50] sm:$0xff]
        %v262 = vld [vmem:[%s211 + $0x58] sm:$0xff]
        %v263 = vld [vmem:[%s211 + $0x60] sm:$0xff]
        %v264 = vld [vmem:[%s211 + $0x68] sm:$0xff]
        %v265 = vld [vmem:[%s211 + $0x70] sm:$0xff]
        %v266 = vld [vmem:[%s211 + $0x78] sm:$0xff]
        %v267 = vld [vmem:[%s211 + $0x80] sm:$0xff]
        %v268 = vld [vmem:[%s211 + $0x88] sm:$0xff]
        %v269 = vld [vmem:[%s211 + $0x90] sm:$0xff]
        %v270 = vld [vmem:[%s211 + $0x98] sm:$0xff]
        %v271 = vld [vmem:[%s211 + $0xa0] sm:$0xff]
        %v272 = vld [vmem:[%s211 + $0xa8] sm:$0xff]
        %v273 = vld [vmem:[%s211 + $0xb0] sm:$0xff]
        %v274 = vld [vmem:[%s211 + $0xb8] sm:$0xff]
        %v275 = vld [vmem:[%s211 + $0xc0] sm:$0xff]
        %v276 = vld [vmem:[%s211 + $0xc8] sm:$0xff]
        %v277 = vld [vmem:[%s211 + $0xd0] sm:$0xff]
        %v278 = vld [vmem:[%s211 + $0xd8] sm:$0xff]
        %v279 = vld [vmem:[%s211 + $0xe0] sm:$0xff]
        %v280 = vld [vmem:[%s211 + $0xe8] sm:$0xff]
        %v281 = vld [vmem:[%s211 + $0xf0] sm:$0xff]
        %v282 = vld [vmem:[%s211 + $0xf8] sm:$0xff]
        %v283 = vld [vmem:[%s211 + $0x100] sm:$0xff]
        %v284 = vld [vmem:[%s211 + $0x108] sm:$0xff]
        %v285 = vld [vmem:[%s211 + $0x110] sm:$0xff]
        %v286 = vld [vmem:[%s211 + $0x118] sm:$0xff]
        %v287 = vld [vmem:[%s211 + $0x120] sm:$0xff]
        %v288 = vld [vmem:[%s211 + $0x128] sm:$0xff]
        %v289 = vld [vmem:[%s211 + $0x130] sm:$0xff]
        %v290 = vld [vmem:[%s211 + $0x138] sm:$0xff]
        %v291 = vld [vmem:[%s211 + $0x140] sm:$0xff]
        %v292 = vld [vmem:[%s211 + $0x148] sm:$0xff]
        %v293 = vld [vmem:[%s211 + $0x150] sm:$0xff]
        %v294 = vld [vmem:[%s211 + $0x158] sm:$0xff]
        %v295 = vld [vmem:[%s211 + $0x160] sm:$0xff]
        %v296 = vld [vmem:[%s211 + $0x168] sm:$0xff]
        %v297 = vld [vmem:[%s211 + $0x170] sm:$0xff]
        %v298 = vld [vmem:[%s211 + $0x178] sm:$0xff]
        %v299 = vld [vmem:[%s211 + $0x180] sm:$0xff]
        %v300 = vld [vmem:[%s211 + $0x188] sm:$0xff]
        %v301 = vld [vmem:[%s211 + $0x190] sm:$0xff]
        %v302 = vld [vmem:[%s211 + $0x198] sm:$0xff]
        %v303 = vld [vmem:[%s211 + $0x1a0] sm:$0xff]
        %v304 = vld [vmem:[%s211 + $0x1a8] sm:$0xff]
        %v305 = vld [vmem:[%s211 + $0x1b0] sm:$0xff]
        %v306 = vld [vmem:[%s211 + $0x1b8] sm:$0xff]
        %v307 = vld [vmem:[%s211 + $0x1c0] sm:$0xff]
        %v308 = vld [vmem:[%s211 + $0x1c8] sm:$0xff]
        %v309 = vld [vmem:[%s211 + $0x1d0] sm:$0xff]
        %v310 = vld [vmem:[%s211 + $0x1d8] sm:$0xff]
        %v311 = vld [vmem:[%s211 + $0x1e0] sm:$0xff]
        %v312 = vld [vmem:[%s211 + $0x1e8] sm:$0xff]
        %v313 = vld [vmem:[%s211 + $0x1f0] sm:$0xff]
        %v314 = vld [vmem:[%s211 + $0x1f8] sm:$0xff]
        %v315 = vld [vmem:[#allocation5] sm:$0xff]
        %v316 = vld [vmem:[#allocation5 + $0x8] sm:$0xff]
        %v317 = vld [vmem:[#allocation5 + $0x10] sm:$0xff]
        %v318 = vld [vmem:[#allocation5 + $0x18] sm:$0xff]
        %v319 = vld [vmem:[#allocation5 + $0x20] sm:$0xff]
        %v320 = vld [vmem:[#allocation5 + $0x28] sm:$0xff]
        %v321 = vld [vmem:[#allocation5 + $0x30] sm:$0xff]
        %v322 = vld [vmem:[#allocation5 + $0x38] sm:$0xff]
        %v323 = vld [vmem:[#allocation5 + $0x40] sm:$0xff]
        %v324 = vld [vmem:[#allocation5 + $0x48] sm:$0xff]
        %v325 = vld [vmem:[#allocation5 + $0x50] sm:$0xff]
        %v326 = vld [vmem:[#allocation5 + $0x58] sm:$0xff]
        %v327 = vld [vmem:[#allocation5 + $0x60] sm:$0xff]
        %v328 = vld [vmem:[#allocation5 + $0x68] sm:$0xff]
        %v329 = vld [vmem:[#allocation5 + $0x70] sm:$0xff]
        %v330 = vld [vmem:[#allocation5 + $0x78] sm:$0xff]
        %v331 = vld [vmem:[#allocation5 + $0x80] sm:$0xff]
        %v332 = vld [vmem:[#allocation5 + $0x88] sm:$0xff]
        %v333 = vld [vmem:[#allocation5 + $0x90] sm:$0xff]
        %v334 = vld [vmem:[#allocation5 + $0x98] sm:$0xff]
        %v335 = vld [vmem:[#allocation5 + $0xa0] sm:$0xff]
        %v336 = vld [vmem:[#allocation5 + $0xa8] sm:$0xff]
        %v337 = vld [vmem:[#allocation5 + $0xb0] sm:$0xff]
        %v338 = vld [vmem:[#allocation5 + $0xb8] sm:$0xff]
        %v339 = vld [vmem:[#allocation5 + $0xc0] sm:$0xff]
        %v340 = vld [vmem:[#allocation5 + $0xc8] sm:$0xff]
        %v341 = vld [vmem:[#allocation5 + $0xd0] sm:$0xff]
        %v342 = vld [vmem:[#allocation5 + $0xd8] sm:$0xff]
        %v343 = vld [vmem:[#allocation5 + $0xe0] sm:$0xff]
        %v344 = vld [vmem:[#allocation5 + $0xe8] sm:$0xff]
        %v345 = vld [vmem:[#allocation5 + $0xf0] sm:$0xff]
        %v346 = vld [vmem:[#allocation5 + $0xf8] sm:$0xff]
        %v347 = vld [vmem:[#allocation5 + $0x100] sm:$0xff]
        %v348 = vld [vmem:[#allocation5 + $0x108] sm:$0xff]
        %v349 = vld [vmem:[#allocation5 + $0x110] sm:$0xff]
        %v350 = vld [vmem:[#allocation5 + $0x118] sm:$0xff]
        %v351 = vld [vmem:[#allocation5 + $0x120] sm:$0xff]
        %v352 = vld [vmem:[#allocation5 + $0x128] sm:$0xff]
        %v353 = vld [vmem:[#allocation5 + $0x130] sm:$0xff]
        %v354 = vld [vmem:[#allocation5 + $0x138] sm:$0xff]
        %v355 = vld [vmem:[#allocation5 + $0x140] sm:$0xff]
        %v356 = vld [vmem:[#allocation5 + $0x148] sm:$0xff]
        %v357 = vld [vmem:[#allocation5 + $0x150] sm:$0xff]
        %v358 = vld [vmem:[#allocation5 + $0x158] sm:$0xff]
        %v359 = vld [vmem:[#allocation5 + $0x160] sm:$0xff]
        %v360 = vld [vmem:[#allocation5 + $0x168] sm:$0xff]
        %v361 = vld [vmem:[#allocation5 + $0x170] sm:$0xff]
        %v362 = vld [vmem:[#allocation5 + $0x178] sm:$0xff]
        %v363 = vld [vmem:[#allocation5 + $0x180] sm:$0xff]
        %v364 = vld [vmem:[#allocation5 + $0x188] sm:$0xff]
        %v365 = vld [vmem:[#allocation5 + $0x190] sm:$0xff]
        %v366 = vld [vmem:[#allocation5 + $0x198] sm:$0xff]
        %v367 = vld [vmem:[#allocation5 + $0x1a0] sm:$0xff]
        %v368 = vld [vmem:[#allocation5 + $0x1a8] sm:$0xff]
        %v369 = vld [vmem:[#allocation5 + $0x1b0] sm:$0xff]
        %v370 = vld [vmem:[#allocation5 + $0x1b8] sm:$0xff]
        %v371 = vld [vmem:[#allocation5 + $0x1c0] sm:$0xff]
        %v372 = vld [vmem:[#allocation5 + $0x1c8] sm:$0xff]
        %v373 = vld [vmem:[#allocation5 + $0x1d0] sm:$0xff]
        %v374 = vld [vmem:[#allocation5 + $0x1d8] sm:$0xff]
        %v375 = vld [vmem:[#allocation5 + $0x1e0] sm:$0xff]
        %v376 = vld [vmem:[#allocation5 + $0x1e8] sm:$0xff]
        %v377 = vld [vmem:[#allocation5 + $0x1f0] sm:$0xff]
        %v378 = vld [vmem:[#allocation5 + $0x1f8] sm:$0xff]
        %v379 = vld [vmem:[#allocation5 + $0x200] sm:$0xff]
        %v380 = vld [vmem:[#allocation5 + $0x208] sm:$0xff]
        %v381 = vld [vmem:[#allocation5 + $0x210] sm:$0xff]
        %v382 = vld [vmem:[#allocation5 + $0x218] sm:$0xff]
        %v383 = vld [vmem:[#allocation5 + $0x220] sm:$0xff]
        %v384 = vld [vmem:[#allocation5 + $0x228] sm:$0xff]
        %v385 = vld [vmem:[#allocation5 + $0x230] sm:$0xff]
        %v386 = vld [vmem:[#allocation5 + $0x238] sm:$0xff]
        %v387 = vld [vmem:[#allocation5 + $0x240] sm:$0xff]
        %v388 = vld [vmem:[#allocation5 + $0x248] sm:$0xff]
        %v389 = vld [vmem:[#allocation5 + $0x250] sm:$0xff]
        %v390 = vld [vmem:[#allocation5 + $0x258] sm:$0xff]
        %v391 = vld [vmem:[#allocation5 + $0x260] sm:$0xff]
        %v392 = vld [vmem:[#allocation5 + $0x268] sm:$0xff]
        %v393 = vld [vmem:[#allocation5 + $0x270] sm:$0xff]
        %v394 = vld [vmem:[#allocation5 + $0x278] sm:$0xff]
        %v395 = vld [vmem:[#allocation5 + $0x280] sm:$0xff]
        %v396 = vld [vmem:[#allocation5 + $0x288] sm:$0xff]
        %v397 = vld [vmem:[#allocation5 + $0x290] sm:$0xff]
        %v398 = vld [vmem:[#allocation5 + $0x298] sm:$0xff]
        %v399 = vld [vmem:[#allocation5 + $0x2a0] sm:$0xff]
        %v400 = vld [vmem:[#allocation5 + $0x2a8] sm:$0xff]
        %v401 = vld [vmem:[#allocation5 + $0x2b0] sm:$0xff]
        %v402 = vld [vmem:[#allocation5 + $0x2b8] sm:$0xff]
        %v403 = vld [vmem:[#allocation5 + $0x2c0] sm:$0xff]
        %v404 = vld [vmem:[#allocation5 + $0x2c8] sm:$0xff]
        %v405 = vld [vmem:[#allocation5 + $0x2d0] sm:$0xff]
        %v406 = vld [vmem:[#allocation5 + $0x2d8] sm:$0xff]
        %v407 = vld [vmem:[#allocation5 + $0x2e0] sm:$0xff]
        %v408 = vld [vmem:[#allocation5 + $0x2e8] sm:$0xff]
        %v409 = vld [vmem:[#allocation5 + $0x2f0] sm:$0xff]
        %v410 = vld [vmem:[#allocation5 + $0x2f8] sm:$0xff]
        %v411 = vld [vmem:[#allocation5 + $0x300] sm:$0xff]
        %v412 = vld [vmem:[#allocation5 + $0x308] sm:$0xff]
        %v413 = vld [vmem:[#allocation5 + $0x310] sm:$0xff]
        %v414 = vld [vmem:[#allocation5 + $0x318] sm:$0xff]
        %v415 = vld [vmem:[#allocation5 + $0x320] sm:$0xff]
        %v416 = vld [vmem:[#allocation5 + $0x328] sm:$0xff]
        %v417 = vld [vmem:[#allocation5 + $0x330] sm:$0xff]
        %v418 = vld [vmem:[#allocation5 + $0x338] sm:$0xff]
        %v419 = vld [vmem:[#allocation5 + $0x340] sm:$0xff]
        %v420 = vld [vmem:[#allocation5 + $0x348] sm:$0xff]
        %v421 = vld [vmem:[#allocation5 + $0x350] sm:$0xff]
        %v422 = vld [vmem:[#allocation5 + $0x358] sm:$0xff]
        %v423 = vld [vmem:[#allocation5 + $0x360] sm:$0xff]
        %v424 = vld [vmem:[#allocation5 + $0x368] sm:$0xff]
        %v425 = vld [vmem:[#allocation5 + $0x370] sm:$0xff]
        %v426 = vld [vmem:[#allocation5 + $0x378] sm:$0xff]
        %v427 = vld [vmem:[#allocation5 + $0x380] sm:$0xff]
        %v428 = vld [vmem:[#allocation5 + $0x388] sm:$0xff]
        %v429 = vld [vmem:[#allocation5 + $0x390] sm:$0xff]
        %v430 = vld [vmem:[#allocation5 + $0x398] sm:$0xff]
        %v431 = vld [vmem:[#allocation5 + $0x3a0] sm:$0xff]
        %v432 = vld [vmem:[#allocation5 + $0x3a8] sm:$0xff]
        %v433 = vld [vmem:[#allocation5 + $0x3b0] sm:$0xff]
        %v434 = vld [vmem:[#allocation5 + $0x3b8] sm:$0xff]
        %v435 = vld [vmem:[#allocation5 + $0x3c0] sm:$0xff]
        %v436 = vld [vmem:[#allocation5 + $0x3c8] sm:$0xff]
        %v437 = vld [vmem:[#allocation5 + $0x3d0] sm:$0xff]
        %v438 = vld [vmem:[#allocation5 + $0x3d8] sm:$0xff]
        %v439 = vld [vmem:[#allocation5 + $0x3e0] sm:$0xff]
        %v440 = vld [vmem:[#allocation5 + $0x3e8] sm:$0xff]
        %v441 = vld [vmem:[#allocation5 + $0x3f0] sm:$0xff]
        %v442 = vld [vmem:[#allocation5 + $0x3f8] sm:$0xff]
        %v443 = vld [vmem:[#allocation5 + $0x400] sm:$0xff]
        %v444 = vld [vmem:[#allocation5 + $0x408] sm:$0xff]
        %v445 = vld [vmem:[#allocation5 + $0x410] sm:$0xff]
        %v446 = vld [vmem:[#allocation5 + $0x418] sm:$0xff]
        %v447 = vld [vmem:[#allocation5 + $0x420] sm:$0xff]
        %v448 = vld [vmem:[#allocation5 + $0x428] sm:$0xff]
        %v449 = vld [vmem:[#allocation5 + $0x430] sm:$0xff]
        %v450 = vld [vmem:[#allocation5 + $0x438] sm:$0xff]
        %v451 = vld [vmem:[#allocation5 + $0x440] sm:$0xff]
        %v452 = vld [vmem:[#allocation5 + $0x448] sm:$0xff]
        %v453 = vld [vmem:[#allocation5 + $0x450] sm:$0xff]
        %v454 = vld [vmem:[#allocation5 + $0x458] sm:$0xff]
        %v455 = vld [vmem:[#allocation5 + $0x460] sm:$0xff]
        %v456 = vld [vmem:[#allocation5 + $0x468] sm:$0xff]
        %v457 = vld [vmem:[#allocation5 + $0x470] sm:$0xff]
        %v458 = vld [vmem:[#allocation5 + $0x478] sm:$0xff]
        %v459 = vld [vmem:[#allocation5 + $0x480] sm:$0xff]
        %v460 = vld [vmem:[#allocation5 + $0x488] sm:$0xff]
        %v461 = vld [vmem:[#allocation5 + $0x490] sm:$0xff]
        %v462 = vld [vmem:[#allocation5 + $0x498] sm:$0xff]
        %v463 = vld [vmem:[#allocation5 + $0x4a0] sm:$0xff]
        %v464 = vld [vmem:[#allocation5 + $0x4a8] sm:$0xff]
        %v465 = vld [vmem:[#allocation5 + $0x4b0] sm:$0xff]
        %v466 = vld [vmem:[#allocation5 + $0x4b8] sm:$0xff]
        %v467 = vld [vmem:[#allocation5 + $0x4c0] sm:$0xff]
        %v468 = vld [vmem:[#allocation5 + $0x4c8] sm:$0xff]
        %v469 = vld [vmem:[#allocation5 + $0x4d0] sm:$0xff]
        %v470 = vld [vmem:[#allocation5 + $0x4d8] sm:$0xff]
        %v471 = vld [vmem:[#allocation5 + $0x4e0] sm:$0xff]
        %v472 = vld [vmem:[#allocation5 + $0x4e8] sm:$0xff]
        %v473 = vld [vmem:[#allocation5 + $0x4f0] sm:$0xff]
        %v474 = vld [vmem:[#allocation5 + $0x4f8] sm:$0xff]
        %v475 = vld [vmem:[#allocation5 + $0x500] sm:$0xff]
        %v476 = vld [vmem:[#allocation5 + $0x508] sm:$0xff]
        %v477 = vld [vmem:[#allocation5 + $0x510] sm:$0xff]
        %v478 = vld [vmem:[#allocation5 + $0x518] sm:$0xff]
        %v479 = vld [vmem:[#allocation5 + $0x520] sm:$0xff]
        %v480 = vld [vmem:[#allocation5 + $0x528] sm:$0xff]
        %v481 = vld [vmem:[#allocation5 + $0x530] sm:$0xff]
        %v482 = vld [vmem:[#allocation5 + $0x538] sm:$0xff]
        %v483 = vld [vmem:[#allocation5 + $0x540] sm:$0xff]
        %v484 = vld [vmem:[#allocation5 + $0x548] sm:$0xff]
        %v485 = vld [vmem:[#allocation5 + $0x550] sm:$0xff]
        %v486 = vld [vmem:[#allocation5 + $0x558] sm:$0xff]
        %v487 = vld [vmem:[#allocation5 + $0x560] sm:$0xff]
        %v488 = vld [vmem:[#allocation5 + $0x568] sm:$0xff]
        %v489 = vld [vmem:[#allocation5 + $0x570] sm:$0xff]
        %v490 = vld [vmem:[#allocation5 + $0x578] sm:$0xff]
        %v491 = vld [vmem:[#allocation5 + $0x580] sm:$0xff]
        %v492 = vld [vmem:[#allocation5 + $0x588] sm:$0xff]
        %v493 = vld [vmem:[#allocation5 + $0x590] sm:$0xff]
        %v494 = vld [vmem:[#allocation5 + $0x598] sm:$0xff]
        %v495 = vld [vmem:[#allocation5 + $0x5a0] sm:$0xff]
        %v496 = vld [vmem:[#allocation5 + $0x5a8] sm:$0xff]
        %v497 = vld [vmem:[#allocation5 + $0x5b0] sm:$0xff]
        %v498 = vld [vmem:[#allocation5 + $0x5b8] sm:$0xff]
        %v499 = vld [vmem:[#allocation5 + $0x5c0] sm:$0xff]
        %v500 = vld [vmem:[#allocation5 + $0x5c8] sm:$0xff]
        %v501 = vld [vmem:[#allocation5 + $0x5d0] sm:$0xff]
        %v502 = vld [vmem:[#allocation5 + $0x5d8] sm:$0xff]
        %v503 = vld [vmem:[#allocation5 + $0x5e0] sm:$0xff]
        %v504 = vld [vmem:[#allocation5 + $0x5e8] sm:$0xff]
        %v505 = vld [vmem:[#allocation5 + $0x5f0] sm:$0xff]
        %v506 = vld [vmem:[#allocation5 + $0x5f8] sm:$0xff]
        %v507 = vld [vmem:[%s247] sm:$0x7]
        %v509 = vlaneseq
        %v510 = vshrl.u32 %v509, 7
        %v511 = vsub.s32 0, %v510
        %v512 = vrot.slane %v507, %v511
        %v513 = vlaneseq
        %v514 = vshrl.u32 %v513, 7
        %v515 = vsub.s32 1, %v514
        %v516 = vrot.slane %v507, %v515
        %v517 = vlaneseq
        %v518 = vshrl.u32 %v517, 7
        %v519 = vsub.s32 2, %v518
        %v520 = vrot.slane %v507, %v519
        %524 = vmatprep.subr.mxu0 %v316
        %525 = vmatpush1.xpose.msra.mxu0 %v315
        %526 = vmatprep.subr.mxu0 %v320
        %527 = vmatpush1.xpose.msra.mxu0 %v319
        %528 = vmatprep.subr.mxu0 %v324
        %529 = vmatpush1.xpose.msra.mxu0 %v323
        %530 = vmatprep.subr.mxu0 %v328
        %531 = vmatpush1.xpose.msra.mxu0 %v327
        %532 = vmatprep.subr.mxu0 %v332
        %533 = vmatpush1.xpose.msra.mxu0 %v331
        %534 = vmatprep.subr.mxu0 %v336
        %535 = vmatpush1.xpose.msra.mxu0 %v335
        %536 = vmatprep.subr.mxu0 %v340
        %537 = vmatpush1.xpose.msra.mxu0 %v339
        %538 = vmatprep.subr.mxu0 %v344
        %539 = vmatpush1.xpose.msra.mxu0 %v343
        %540 = vmatprep.subr.mxu0 %v348
        %541 = vmatpush1.xpose.msra.mxu0 %v347
        %542 = vmatprep.subr.mxu0 %v352
        %543 = vmatpush1.xpose.msra.mxu0 %v351
        %544 = vmatprep.subr.mxu0 %v356
        %545 = vmatpush1.xpose.msra.mxu0 %v355
        %546 = vmatprep.subr.mxu0 %v360
        %547 = vmatpush1.xpose.msra.mxu0 %v359
        %548 = vmatprep.subr.mxu0 %v364
        %549 = vmatpush1.xpose.msra.mxu0 %v363
        %550 = vmatprep.subr.mxu0 %v368
        %551 = vmatpush1.xpose.msra.mxu0 %v367
        %552 = vmatprep.subr.mxu0 %v372
        %553 = vmatpush1.xpose.msra.mxu0 %v371
        %554 = vmatprep.subr.mxu0 %v376
        %555 = vmatpush1.xpose.msra.mxu0 %v375
        %556 = vmatprep.subr.mxu0 %v380
        %557 = vmatpush1.xpose.msra.mxu0 %v379
        %558 = vmatprep.subr.mxu0 %v384
        %559 = vmatpush1.xpose.msra.mxu0 %v383
        %560 = vmatprep.subr.mxu0 %v388
        %561 = vmatpush1.xpose.msra.mxu0 %v387
        %562 = vmatprep.subr.mxu0 %v392
        %563 = vmatpush1.xpose.msra.mxu0 %v391
        %564 = vmatprep.subr.mxu0 %v396
        %565 = vmatpush1.xpose.msra.mxu0 %v395
        %566 = vmatprep.subr.mxu0 %v400
        %567 = vmatpush1.xpose.msra.mxu0 %v399
        %568 = vmatprep.subr.mxu0 %v404
        %569 = vmatpush1.xpose.msra.mxu0 %v403
        %570 = vmatprep.subr.mxu0 %v408
        %571 = vmatpush1.xpose.msra.mxu0 %v407
        %572 = vmatprep.subr.mxu0 %v412
        %573 = vmatpush1.xpose.msra.mxu0 %v411
        %574 = vmatprep.subr.mxu0 %v416
        %575 = vmatpush1.xpose.msra.mxu0 %v415
        %576 = vmatprep.subr.mxu0 %v420
        %577 = vmatpush1.xpose.msra.mxu0 %v419
        %578 = vmatprep.subr.mxu0 %v424
        %579 = vmatpush1.xpose.msra.mxu0 %v423
        %580 = vmatprep.subr.mxu0 %v428
        %581 = vmatpush1.xpose.msra.mxu0 %v427
        %582 = vmatprep.subr.mxu0 %v432
        %583 = vmatpush1.xpose.msra.mxu0 %v431
        %584 = vmatprep.subr.mxu0 %v436
        %585 = vmatpush1.xpose.msra.mxu0 %v435
        %586 = vmatprep.subr.mxu0 %v440
        %587 = vmatpush1.xpose.msra.mxu0 %v439
        %588 = vmatprep.mubr.f32.mxu0 %v252
        %589 = vmatmul.mubr.f32.gmra.mrb[0].mxu0 %v251
        %v590 = vpop.f32.mrb[0].mxu0
        %v591 = vadd.f32 %v512, %v590
        %v592 = vpop.f32.mrb[0].mxu0
        %v593 = vadd.f32 %v516, %v592
        %594 = vmatprep.mubr.f32.mxu0 %v256
        %595 = vmatmul.mubr.f32.gmra.mrb[0].mxu0 %v255
        %v596 = vpop.f32.mrb[0].mxu0
        %v597 = vadd.f32 %v512, %v596
        %v598 = vpop.f32.mrb[0].mxu0
        %v599 = vadd.f32 %v516, %v598
        %600 = vmatprep.mubr.f32.mxu0 %v260
        %601 = vmatmul.mubr.f32.gmra.mrb[0].mxu0 %v259
        %v602 = vpop.f32.mrb[0].mxu0
        %v603 = vadd.f32 %v512, %v602
        %v604 = vpop.f32.mrb[0].mxu0
        %v605 = vadd.f32 %v516, %v604
        %606 = vmatprep.mubr.f32.mxu0 %v264
        %607 = vmatmul.mubr.f32.gmra.mrb[0].mxu0 %v263
        %v608 = vpop.f32.mrb[0].mxu0
        %v609 = vadd.f32 %v512, %v608
        %v610 = vpop.f32.mrb[0].mxu0
        %v611 = vadd.f32 %v516, %v610
        %612 = vmatprep.mubr.f32.mxu0 %v268
        %613 = vmatmul.mubr.f32.gmra.mrb[0].mxu0 %v267
        %v614 = vpop.f32.mrb[0].mxu0
        %v615 = vadd.f32 %v512, %v614
        %v616 = vpop.f32.mrb[0].mxu0
        %v617 = vadd.f32 %v516, %v616
        %618 = vmatprep.mubr.f32.mxu0 %v272
        %619 = vmatmul.mubr.f32.gmra.mrb[0].mxu0 %v271
        %v620 = vpop.f32.mrb[0].mxu0
        %v621 = vadd.f32 %v512, %v620
        %v622 = vpop.f32.mrb[0].mxu0
        %v623 = vadd.f32 %v516, %v622
        %624 = vmatprep.mubr.f32.mxu0 %v276
        %625 = vmatmul.mubr.f32.gmra.mrb[0].mxu0 %v275
        %v626 = vpop.f32.mrb[0].mxu0
        %v627 = vadd.f32 %v512, %v626
        %v628 = vpop.f32.mrb[0].mxu0
        %v629 = vadd.f32 %v516, %v628
        %630 = vmatprep.mubr.f32.mxu0 %v280
        %631 = vmatmul.mubr.f32.gmra.mrb[0].mxu0 %v279
        %v632 = vpop.f32.mrb[0].mxu0
        %v633 = vadd.f32 %v512, %v632
        %v634 = vpop.f32.mrb[0].mxu0
        %v635 = vadd.f32 %v516, %v634
        %636 = vmatprep.mubr.f32.mxu0 %v284
        %637 = vmatmul.mubr.f32.gmra.mrb[0].mxu0 %v283
        %v638 = vpop.f32.mrb[0].mxu0
        %v639 = vadd.f32 %v512, %v638
        %v640 = vpop.f32.mrb[0].mxu0
        %v641 = vadd.f32 %v516, %v640
        %642 = vmatprep.mubr.f32.mxu0 %v288
        %643 = vmatmul.mubr.f32.gmra.mrb[0].mxu0 %v287
        %v644 = vpop.f32.mrb[0].mxu0
        %v645 = vadd.f32 %v512, %v644
        %v646 = vpop.f32.mrb[0].mxu0
        %v647 = vadd.f32 %v516, %v646
        %648 = vmatprep.mubr.f32.mxu0 %v292
        %649 = vmatmul.mubr.f32.gmra.mrb[0].mxu0 %v291
        %v650 = vpop.f32.mrb[0].mxu0
        %v651 = vadd.f32 %v512, %v650
        %v652 = vpop.f32.mrb[0].mxu0
        %v653 = vadd.f32 %v516, %v652
        %654 = vmatprep.mubr.f32.mxu0 %v296
        %655 = vmatmul.mubr.f32.gmra.mrb[0].mxu0 %v295
        %v656 = vpop.f32.mrb[0].mxu0
        %v657 = vadd.f32 %v512, %v656
        %v658 = vpop.f32.mrb[0].mxu0
        %v659 = vadd.f32 %v516, %v658
        %660 = vmatprep.mubr.f32.mxu0 %v300
        %661 = vmatmul.mubr.f32.gmra.mrb[0].mxu0 %v299
        %v662 = vpop.f32.mrb[0].mxu0
        %v663 = vadd.f32 %v512, %v662
        %v664 = vpop.f32.mrb[0].mxu0
        %v665 = vadd.f32 %v516, %v664
        %666 = vmatprep.mubr.f32.mxu0 %v304
        %667 = vmatmul.mubr.f32.gmra.mrb[0].mxu0 %v303
        %v668 = vpop.f32.mrb[0].mxu0
        %v669 = vadd.f32 %v512, %v668
        %v670 = vpop.f32.mrb[0].mxu0
        %v671 = vadd.f32 %v516, %v670
        %672 = vmatprep.mubr.f32.mxu0 %v308
        %673 = vmatmul.mubr.f32.gmra.mrb[0].mxu0 %v307
        %v674 = vpop.f32.mrb[0].mxu0
        %v675 = vadd.f32 %v512, %v674
        %v676 = vpop.f32.mrb[0].mxu0
        %v677 = vadd.f32 %v516, %v676
        %678 = vmatprep.mubr.f32.mxu0 %v312
        %679 = vmatmul.mubr.f32.gmra.mrb[0].mxu0 %v311
        %v680 = vpop.f32.mrb[0].mxu0
        %v681 = vadd.f32 %v512, %v680
        %v682 = vpop.f32.mrb[0].mxu0
        %v683 = vadd.f32 %v516, %v682
        %684 = vdwg.mxu0
        %685 = vmatprep.subr.mxu0 %v318
        %686 = vmatpush1.xpose.msra.mxu0 %v317
        %687 = vmatprep.subr.mxu0 %v322
        %688 = vmatpush1.xpose.msra.mxu0 %v321
        %689 = vmatprep.subr.mxu0 %v326
        %690 = vmatpush1.xpose.msra.mxu0 %v325
        %691 = vmatprep.subr.mxu0 %v330
        %692 = vmatpush1.xpose.msra.mxu0 %v329
        %693 = vmatprep.subr.mxu0 %v334
        %694 = vmatpush1.xpose.msra.mxu0 %v333
        %695 = vmatprep.subr.mxu0 %v338
        %696 = vmatpush1.xpose.msra.mxu0 %v337
        %697 = vmatprep.subr.mxu0 %v342
        %698 = vmatpush1.xpose.msra.mxu0 %v341
        %699 = vmatprep.subr.mxu0 %v346
        %700 = vmatpush1.xpose.msra.mxu0 %v345
        %701 = vmatprep.subr.mxu0 %v350
        %702 = vmatpush1.xpose.msra.mxu0 %v349
        %703 = vmatprep.subr.mxu0 %v354
        %704 = vmatpush1.xpose.msra.mxu0 %v353
        %705 = vmatprep.subr.mxu0 %v358
        %706 = vmatpush1.xpose.msra.mxu0 %v357
        %707 = vmatprep.subr.mxu0 %v362
        %708 = vmatpush1.xpose.msra.mxu0 %v361
        %709 = vmatprep.subr.mxu0 %v366
        %710 = vmatpush1.xpose.msra.mxu0 %v365
        %711 = vmatprep.subr.mxu0 %v370
        %712 = vmatpush1.xpose.msra.mxu0 %v369
        %713 = vmatprep.subr.mxu0 %v374
        %714 = vmatpush1.xpose.msra.mxu0 %v373
        %715 = vmatprep.subr.mxu0 %v378
        %716 = vmatpush1.xpose.msra.mxu0 %v377
        %717 = vmatprep.subr.mxu0 %v382
        %718 = vmatpush1.xpose.msra.mxu0 %v381
        %719 = vmatprep.subr.mxu0 %v386
        %720 = vmatpush1.xpose.msra.mxu0 %v385
        %721 = vmatprep.subr.mxu0 %v390
        %722 = vmatpush1.xpose.msra.mxu0 %v389
        %723 = vmatprep.subr.mxu0 %v394
        %724 = vmatpush1.xpose.msra.mxu0 %v393
        %725 = vmatprep.subr.mxu0 %v398
        %726 = vmatpush1.xpose.msra.mxu0 %v397
        %727 = vmatprep.subr.mxu0 %v402
        %728 = vmatpush1.xpose.msra.mxu0 %v401
        %729 = vmatprep.subr.mxu0 %v406
        %730 = vmatpush1.xpose.msra.mxu0 %v405
        %731 = vmatprep.subr.mxu0 %v410
        %732 = vmatpush1.xpose.msra.mxu0 %v409
        %733 = vmatprep.subr.mxu0 %v414
        %734 = vmatpush1.xpose.msra.mxu0 %v413
        %735 = vmatprep.subr.mxu0 %v418
        %736 = vmatpush1.xpose.msra.mxu0 %v417
        %737 = vmatprep.subr.mxu0 %v422
        %738 = vmatpush1.xpose.msra.mxu0 %v421
        %739 = vmatprep.subr.mxu0 %v426
        %740 = vmatpush1.xpose.msra.mxu0 %v425
        %741 = vmatprep.subr.mxu0 %v430
        %742 = vmatpush1.xpose.msra.mxu0 %v429
        %743 = vmatprep.subr.mxu0 %v434
        %744 = vmatpush1.xpose.msra.mxu0 %v433
        %745 = vmatprep.subr.mxu0 %v438
        %746 = vmatpush1.xpose.msra.mxu0 %v437
        %747 = vmatprep.subr.mxu0 %v442
        %748 = vmatpush1.xpose.msra.mxu0 %v441
        %749 = vmatprep.mubr.f32.mxu0 %v254
        %750 = vmatmul.mubr.f32.gmra.mrb[0].mxu0 %v253
        %v751 = vpop.f32.mrb[0].mxu0
        %v752 = vadd.f32 %v591, %v751
        %v753 = vpop.f32.mrb[0].mxu0
        %v754 = vadd.f32 %v593, %v753
        %755 = vmatprep.mubr.f32.mxu0 %v258
        %756 = vmatmul.mubr.f32.gmra.mrb[0].mxu0 %v257
        %v757 = vpop.f32.mrb[0].mxu0
        %v758 = vadd.f32 %v597, %v757
        %v759 = vpop.f32.mrb[0].mxu0
        %v760 = vadd.f32 %v599, %v759
        %761 = vmatprep.mubr.f32.mxu0 %v262
        %762 = vmatmul.mubr.f32.gmra.mrb[0].mxu0 %v261
        %v763 = vpop.f32.mrb[0].mxu0
        %v764 = vadd.f32 %v603, %v763
        %v765 = vpop.f32.mrb[0].mxu0
        %v766 = vadd.f32 %v605, %v765
        %767 = vmatprep.mubr.f32.mxu0 %v266
        %768 = vmatmul.mubr.f32.gmra.mrb[0].mxu0 %v265
        %v769 = vpop.f32.mrb[0].mxu0
        %v770 = vadd.f32 %v609, %v769
        %v771 = vpop.f32.mrb[0].mxu0
        %v772 = vadd.f32 %v611, %v771
        %773 = vmatprep.mubr.f32.mxu0 %v270
        %774 = vmatmul.mubr.f32.gmra.mrb[0].mxu0 %v269
        %v775 = vpop.f32.mrb[0].mxu0
        %v776 = vadd.f32 %v615, %v775
        %v777 = vpop.f32.mrb[0].mxu0
        %v778 = vadd.f32 %v617, %v777
        %779 = vmatprep.mubr.f32.mxu0 %v274
        %780 = vmatmul.mubr.f32.gmra.mrb[0].mxu0 %v273
        %v781 = vpop.f32.mrb[0].mxu0
        %v782 = vadd.f32 %v621, %v781
        %v783 = vpop.f32.mrb[0].mxu0
        %v784 = vadd.f32 %v623, %v783
        %785 = vmatprep.mubr.f32.mxu0 %v278
        %786 = vmatmul.mubr.f32.gmra.mrb[0].mxu0 %v277
        %v787 = vpop.f32.mrb[0].mxu0
        %v788 = vadd.f32 %v627, %v787
        %v789 = vpop.f32.mrb[0].mxu0
        %v790 = vadd.f32 %v629, %v789
        %791 = vmatprep.mubr.f32.mxu0 %v282
        %792 = vmatmul.mubr.f32.gmra.mrb[0].mxu0 %v281
        %v793 = vpop.f32.mrb[0].mxu0
        %v794 = vadd.f32 %v633, %v793
        %v795 = vpop.f32.mrb[0].mxu0
        %v796 = vadd.f32 %v635, %v795
        %797 = vmatprep.mubr.f32.mxu0 %v286
        %798 = vmatmul.mubr.f32.gmra.mrb[0].mxu0 %v285
        %v799 = vpop.f32.mrb[0].mxu0
        %v800 = vadd.f32 %v639, %v799
        %v801 = vpop.f32.mrb[0].mxu0
        %v802 = vadd.f32 %v641, %v801
        %803 = vmatprep.mubr.f32.mxu0 %v290
        %804 = vmatmul.mubr.f32.gmra.mrb[0].mxu0 %v289
        %v805 = vpop.f32.mrb[0].mxu0
        %v806 = vadd.f32 %v645, %v805
        %v807 = vpop.f32.mrb[0].mxu0
        %v808 = vadd.f32 %v647, %v807
        %809 = vmatprep.mubr.f32.mxu0 %v294
        %810 = vmatmul.mubr.f32.gmra.mrb[0].mxu0 %v293
        %v811 = vpop.f32.mrb[0].mxu0
        %v812 = vadd.f32 %v651, %v811
        %v813 = vpop.f32.mrb[0].mxu0
        %v814 = vadd.f32 %v653, %v813
        %815 = vmatprep.mubr.f32.mxu0 %v298
        %816 = vmatmul.mubr.f32.gmra.mrb[0].mxu0 %v297
        %v817 = vpop.f32.mrb[0].mxu0
        %v818 = vadd.f32 %v657, %v817
        %v819 = vpop.f32.mrb[0].mxu0
        %v820 = vadd.f32 %v659, %v819
        %821 = vmatprep.mubr.f32.mxu0 %v302
        %822 = vmatmul.mubr.f32.gmra.mrb[0].mxu0 %v301
        %v823 = vpop.f32.mrb[0].mxu0
        %v824 = vadd.f32 %v663, %v823
        %v825 = vpop.f32.mrb[0].mxu0
        %v826 = vadd.f32 %v665, %v825
        %827 = vmatprep.mubr.f32.mxu0 %v306
        %828 = vmatmul.mubr.f32.gmra.mrb[0].mxu0 %v305
        %v829 = vpop.f32.mrb[0].mxu0
        %v830 = vadd.f32 %v669, %v829
        %v831 = vpop.f32.mrb[0].mxu0
        %v832 = vadd.f32 %v671, %v831
        %833 = vmatprep.mubr.f32.mxu0 %v310
        %834 = vmatmul.mubr.f32.gmra.mrb[0].mxu0 %v309
        %v835 = vpop.f32.mrb[0].mxu0
        %v836 = vadd.f32 %v675, %v835
        %v837 = vpop.f32.mrb[0].mxu0
        %v838 = vadd.f32 %v677, %v837
        %839 = vmatprep.mubr.f32.mxu0 %v314
        %840 = vmatmul.mubr.f32.gmra.mrb[0].mxu0 %v313
        %v841 = vpop.f32.mrb[0].mxu0
        %v842 = vadd.f32 %v681, %v841
        %v843 = vpop.f32.mrb[0].mxu0
        %v844 = vadd.f32 %v683, %v843
        %845 = vdwg.mxu0
        %846 = vmatprep.subr.mxu0 %v444
        %847 = vmatpush1.xpose.msra.mxu0 %v443
        %848 = vmatprep.subr.mxu0 %v448
        %849 = vmatpush1.xpose.msra.mxu0 %v447
        %850 = vmatprep.subr.mxu0 %v452
        %851 = vmatpush1.xpose.msra.mxu0 %v451
        %852 = vmatprep.subr.mxu0 %v456
        %853 = vmatpush1.xpose.msra.mxu0 %v455
        %854 = vmatprep.subr.mxu0 %v460
        %855 = vmatpush1.xpose.msra.mxu0 %v459
        %856 = vmatprep.subr.mxu0 %v464
        %857 = vmatpush1.xpose.msra.mxu0 %v463
        %858 = vmatprep.subr.mxu0 %v468
        %859 = vmatpush1.xpose.msra.mxu0 %v467
        %860 = vmatprep.subr.mxu0 %v472
        %861 = vmatpush1.xpose.msra.mxu0 %v471
        %862 = vmatprep.subr.mxu0 %v476
        %863 = vmatpush1.xpose.msra.mxu0 %v475
        %864 = vmatprep.subr.mxu0 %v480
        %865 = vmatpush1.xpose.msra.mxu0 %v479
        %866 = vmatprep.subr.mxu0 %v484
        %867 = vmatpush1.xpose.msra.mxu0 %v483
        %868 = vmatprep.subr.mxu0 %v488
        %869 = vmatpush1.xpose.msra.mxu0 %v487
        %870 = vmatprep.subr.mxu0 %v492
        %871 = vmatpush1.xpose.msra.mxu0 %v491
        %872 = vmatprep.subr.mxu0 %v496
        %873 = vmatpush1.xpose.msra.mxu0 %v495
        %874 = vmatprep.subr.mxu0 %v500
        %875 = vmatpush1.xpose.msra.mxu0 %v499
        %876 = vmatprep.subr.mxu0 %v504
        %877 = vmatpush1.xpose.msra.mxu0 %v503
        %878 = vmatprep.subr.mxu0 0.0
        %879 = vmatpush1.xpose.msra.mxu0 0.0
        %880 = vmatprep.subr.mxu0 0.0
        %881 = vmatpush1.xpose.msra.mxu0 0.0
        %882 = vmatprep.subr.mxu0 0.0
        %883 = vmatpush1.xpose.msra.mxu0 0.0
        %884 = vmatprep.subr.mxu0 0.0
        %885 = vmatpush1.xpose.msra.mxu0 0.0
        %886 = vmatprep.subr.mxu0 0.0
        %887 = vmatpush1.xpose.msra.mxu0 0.0
        %888 = vmatprep.subr.mxu0 0.0
        %889 = vmatpush1.xpose.msra.mxu0 0.0
        %890 = vmatprep.subr.mxu0 0.0
        %891 = vmatpush1.xpose.msra.mxu0 0.0
        %892 = vmatprep.subr.mxu0 0.0
        %893 = vmatpush1.xpose.msra.mxu0 0.0
        %894 = vmatprep.subr.mxu0 0.0
        %895 = vmatpush1.xpose.msra.mxu0 0.0
        %896 = vmatprep.subr.mxu0 0.0
        %897 = vmatpush1.xpose.msra.mxu0 0.0
        %898 = vmatprep.subr.mxu0 0.0
        %899 = vmatpush1.xpose.msra.mxu0 0.0
        %900 = vmatprep.subr.mxu0 0.0
        %901 = vmatpush1.xpose.msra.mxu0 0.0
        %902 = vmatprep.subr.mxu0 0.0
        %903 = vmatpush1.xpose.msra.mxu0 0.0
        %904 = vmatprep.subr.mxu0 0.0
        %905 = vmatpush1.xpose.msra.mxu0 0.0
        %906 = vmatprep.subr.mxu0 0.0
        %907 = vmatpush1.xpose.msra.mxu0 0.0
        %908 = vmatprep.subr.mxu0 0.0
        %909 = vmatpush1.xpose.msra.mxu0 0.0
        %910 = vmatprep.mubr.f32.mxu0 %v252
        %911 = vmatmul.mubr.f32.gmra.mrb[0].mxu0 %v251
        %v912 = vpop.f32.mrb[0].mxu0
        %v913 = vadd.f32 %v520, %v912
        %v914 = vpop.f32.mrb[0].mxu0
        %915 = vmatprep.mubr.f32.mxu0 %v256
        %916 = vmatmul.mubr.f32.gmra.mrb[0].mxu0 %v255
        %v917 = vpop.f32.mrb[0].mxu0
        %v918 = vadd.f32 %v520, %v917
        %v919 = vpop.f32.mrb[0].mxu0
        %920 = vmatprep.mubr.f32.mxu0 %v260
        %921 = vmatmul.mubr.f32.gmra.mrb[0].mxu0 %v259
        %v922 = vpop.f32.mrb[0].mxu0
        %v923 = vadd.f32 %v520, %v922
        %v924 = vpop.f32.mrb[0].mxu0
        %925 = vmatprep.mubr.f32.mxu0 %v264
        %926 = vmatmul.mubr.f32.gmra.mrb[0].mxu0 %v263
        %v927 = vpop.f32.mrb[0].mxu0
        %v928 = vadd.f32 %v520, %v927
        %v929 = vpop.f32.mrb[0].mxu0
        %930 = vmatprep.mubr.f32.mxu0 %v268
        %931 = vmatmul.mubr.f32.gmra.mrb[0].mxu0 %v267
        %v932 = vpop.f32.mrb[0].mxu0
        %v933 = vadd.f32 %v520, %v932
        %v934 = vpop.f32.mrb[0].mxu0
        %935 = vmatprep.mubr.f32.mxu0 %v272
        %936 = vmatmul.mubr.f32.gmra.mrb[0].mxu0 %v271
        %v937 = vpop.f32.mrb[0].mxu0
        %v938 = vadd.f32 %v520, %v937
        %v939 = vpop.f32.mrb[0].mxu0
        %940 = vmatprep.mubr.f32.mxu0 %v276
        %941 = vmatmul.mubr.f32.gmra.mrb[0].mxu0 %v275
        %v942 = vpop.f32.mrb[0].mxu0
        %v943 = vadd.f32 %v520, %v942
        %v944 = vpop.f32.mrb[0].mxu0
        %945 = vmatprep.mubr.f32.mxu0 %v280
        %946 = vmatmul.mubr.f32.gmra.mrb[0].mxu0 %v279
        %v947 = vpop.f32.mrb[0].mxu0
        %v948 = vadd.f32 %v520, %v947
        %v949 = vpop.f32.mrb[0].mxu0
        %950 = vmatprep.mubr.f32.mxu0 %v284
        %951 = vmatmul.mubr.f32.gmra.mrb[0].mxu0 %v283
        %v952 = vpop.f32.mrb[0].mxu0
        %v953 = vadd.f32 %v520, %v952
        %v954 = vpop.f32.mrb[0].mxu0
        %955 = vmatprep.mubr.f32.mxu0 %v288
        %956 = vmatmul.mubr.f32.gmra.mrb[0].mxu0 %v287
        %v957 = vpop.f32.mrb[0].mxu0
        %v958 = vadd.f32 %v520, %v957
        %v959 = vpop.f32.mrb[0].mxu0
        %960 = vmatprep.mubr.f32.mxu0 %v292
        %961 = vmatmul.mubr.f32.gmra.mrb[0].mxu0 %v291
        %v962 = vpop.f32.mrb[0].mxu0
        %v963 = vadd.f32 %v520, %v962
        %v964 = vpop.f32.mrb[0].mxu0
        %965 = vmatprep.mubr.f32.mxu0 %v296
        %966 = vmatmul.mubr.f32.gmra.mrb[0].mxu0 %v295
        %v967 = vpop.f32.mrb[0].mxu0
        %v968 = vadd.f32 %v520, %v967
        %v969 = vpop.f32.mrb[0].mxu0
        %970 = vmatprep.mubr.f32.mxu0 %v300
        %971 = vmatmul.mubr.f32.gmra.mrb[0].mxu0 %v299
        %v972 = vpop.f32.mrb[0].mxu0
        %v973 = vadd.f32 %v520, %v972
        %v974 = vpop.f32.mrb[0].mxu0
        %975 = vmatprep.mubr.f32.mxu0 %v304
        %976 = vmatmul.mubr.f32.gmra.mrb[0].mxu0 %v303
        %v977 = vpop.f32.mrb[0].mxu0
        %v978 = vadd.f32 %v520, %v977
        %v979 = vpop.f32.mrb[0].mxu0
        %980 = vmatprep.mubr.f32.mxu0 %v308
        %981 = vmatmul.mubr.f32.gmra.mrb[0].mxu0 %v307
        %v982 = vpop.f32.mrb[0].mxu0
        %v983 = vadd.f32 %v520, %v982
        %v984 = vpop.f32.mrb[0].mxu0
        %985 = vmatprep.mubr.f32.mxu0 %v312
        %986 = vmatmul.mubr.f32.gmra.mrb[0].mxu0 %v311
        %v987 = vpop.f32.mrb[0].mxu0
        %v988 = vadd.f32 %v520, %v987
        %v989 = vpop.f32.mrb[0].mxu0
        %990 = vdwg.mxu0
        %991 = vmatprep.subr.mxu0 %v446
        %992 = vmatpush1.xpose.msra.mxu0 %v445
        %993 = vmatprep.subr.mxu0 %v450
        %994 = vmatpush1.xpose.msra.mxu0 %v449
        %995 = vmatprep.subr.mxu0 %v454
        %996 = vmatpush1.xpose.msra.mxu0 %v453
        %997 = vmatprep.subr.mxu0 %v458
        %998 = vmatpush1.xpose.msra.mxu0 %v457
        %999 = vmatprep.subr.mxu0 %v462
        %1000 = vmatpush1.xpose.msra.mxu0 %v461
        %1001 = vmatprep.subr.mxu0 %v466
        %1002 = vmatpush1.xpose.msra.mxu0 %v465
        %1003 = vmatprep.subr.mxu0 %v470
        %1004 = vmatpush1.xpose.msra.mxu0 %v469
        %1005 = vmatprep.subr.mxu0 %v474
        %1006 = vmatpush1.xpose.msra.mxu0 %v473
        %1007 = vmatprep.subr.mxu0 %v478
        %1008 = vmatpush1.xpose.msra.mxu0 %v477
        %1009 = vmatprep.subr.mxu0 %v482
        %1010 = vmatpush1.xpose.msra.mxu0 %v481
        %1011 = vmatprep.subr.mxu0 %v486
        %1012 = vmatpush1.xpose.msra.mxu0 %v485
        %1013 = vmatprep.subr.mxu0 %v490
        %1014 = vmatpush1.xpose.msra.mxu0 %v489
        %1015 = vmatprep.subr.mxu0 %v494
        %1016 = vmatpush1.xpose.msra.mxu0 %v493
        %1017 = vmatprep.subr.mxu0 %v498
        %1018 = vmatpush1.xpose.msra.mxu0 %v497
        %1019 = vmatprep.subr.mxu0 %v502
        %1020 = vmatpush1.xpose.msra.mxu0 %v501
        %1021 = vmatprep.subr.mxu0 %v506
        %1022 = vmatpush1.xpose.msra.mxu0 %v505
        %1023 = vmatprep.subr.mxu0 0.0
        %1024 = vmatpush1.xpose.msra.mxu0 0.0
        %1025 = vmatprep.subr.mxu0 0.0
        %1026 = vmatpush1.xpose.msra.mxu0 0.0
        %1027 = vmatprep.subr.mxu0 0.0
        %1028 = vmatpush1.xpose.msra.mxu0 0.0
        %1029 = vmatprep.subr.mxu0 0.0
        %1030 = vmatpush1.xpose.msra.mxu0 0.0
        %1031 = vmatprep.subr.mxu0 0.0
        %1032 = vmatpush1.xpose.msra.mxu0 0.0
        %1033 = vmatprep.subr.mxu0 0.0
        %1034 = vmatpush1.xpose.msra.mxu0 0.0
        %1035 = vmatprep.subr.mxu0 0.0
        %1036 = vmatpush1.xpose.msra.mxu0 0.0
        %1037 = vmatprep.subr.mxu0 0.0
        %1038 = vmatpush1.xpose.msra.mxu0 0.0
        %1039 = vmatprep.subr.mxu0 0.0
        %1040 = vmatpush1.xpose.msra.mxu0 0.0
        %1041 = vmatprep.subr.mxu0 0.0
        %1042 = vmatpush1.xpose.msra.mxu0 0.0
        %1043 = vmatprep.subr.mxu0 0.0
        %1044 = vmatpush1.xpose.msra.mxu0 0.0
        %1045 = vmatprep.subr.mxu0 0.0
        %1046 = vmatpush1.xpose.msra.mxu0 0.0
        %1047 = vmatprep.subr.mxu0 0.0
        %1048 = vmatpush1.xpose.msra.mxu0 0.0
        %1049 = vmatprep.subr.mxu0 0.0
        %1050 = vmatpush1.xpose.msra.mxu0 0.0
        %1051 = vmatprep.subr.mxu0 0.0
        %1052 = vmatpush1.xpose.msra.mxu0 0.0
        %1053 = vmatprep.subr.mxu0 0.0
        %1054 = vmatpush1.xpose.msra.mxu0 0.0
        %1055 = vmatprep.mubr.f32.mxu0 %v254
        %1056 = vmatmul.mubr.f32.gmra.mrb[0].mxu0 %v253
        %v1057 = vpop.f32.mrb[0].mxu0
        %v1058 = vadd.f32 %v913, %v1057
        %v1059 = vpop.f32.mrb[0].mxu0
        %1060 = vmatprep.mubr.f32.mxu0 %v258
        %1061 = vmatmul.mubr.f32.gmra.mrb[0].mxu0 %v257
        %v1062 = vpop.f32.mrb[0].mxu0
        %v1063 = vadd.f32 %v918, %v1062
        %v1064 = vpop.f32.mrb[0].mxu0
        %1065 = vmatprep.mubr.f32.mxu0 %v262
        %1066 = vmatmul.mubr.f32.gmra.mrb[0].mxu0 %v261
        %v1067 = vpop.f32.mrb[0].mxu0
        %v1068 = vadd.f32 %v923, %v1067
        %v1069 = vpop.f32.mrb[0].mxu0
        %1070 = vmatprep.mubr.f32.mxu0 %v266
        %1071 = vmatmul.mubr.f32.gmra.mrb[0].mxu0 %v265
        %v1072 = vpop.f32.mrb[0].mxu0
        %v1073 = vadd.f32 %v928, %v1072
        %v1074 = vpop.f32.mrb[0].mxu0
        %1075 = vmatprep.mubr.f32.mxu0 %v270
        %1076 = vmatmul.mubr.f32.gmra.mrb[0].mxu0 %v269
        %v1077 = vpop.f32.mrb[0].mxu0
        %v1078 = vadd.f32 %v933, %v1077
        %v1079 = vpop.f32.mrb[0].mxu0
        %1080 = vmatprep.mubr.f32.mxu0 %v274
        %1081 = vmatmul.mubr.f32.gmra.mrb[0].mxu0 %v273
        %v1082 = vpop.f32.mrb[0].mxu0
        %v1083 = vadd.f32 %v938, %v1082
        %v1084 = vpop.f32.mrb[0].mxu0
        %1085 = vmatprep.mubr.f32.mxu0 %v278
        %1086 = vmatmul.mubr.f32.gmra.mrb[0].mxu0 %v277
        %v1087 = vpop.f32.mrb[0].mxu0
        %v1088 = vadd.f32 %v943, %v1087
        %v1089 = vpop.f32.mrb[0].mxu0
        %1090 = vmatprep.mubr.f32.mxu0 %v282
        %1091 = vmatmul.mubr.f32.gmra.mrb[0].mxu0 %v281
        %v1092 = vpop.f32.mrb[0].mxu0
        %v1093 = vadd.f32 %v948, %v1092
        %v1094 = vpop.f32.mrb[0].mxu0
        %1095 = vmatprep.mubr.f32.mxu0 %v286
        %1096 = vmatmul.mubr.f32.gmra.mrb[0].mxu0 %v285
        %v1097 = vpop.f32.mrb[0].mxu0
        %v1098 = vadd.f32 %v953, %v1097
        %v1099 = vpop.f32.mrb[0].mxu0
        %1100 = vmatprep.mubr.f32.mxu0 %v290
        %1101 = vmatmul.mubr.f32.gmra.mrb[0].mxu0 %v289
        %v1102 = vpop.f32.mrb[0].mxu0
        %v1103 = vadd.f32 %v958, %v1102
        %v1104 = vpop.f32.mrb[0].mxu0
        %1105 = vmatprep.mubr.f32.mxu0 %v294
        %1106 = vmatmul.mubr.f32.gmra.mrb[0].mxu0 %v293
        %v1107 = vpop.f32.mrb[0].mxu0
        %v1108 = vadd.f32 %v963, %v1107
        %v1109 = vpop.f32.mrb[0].mxu0
        %1110 = vmatprep.mubr.f32.mxu0 %v298
        %1111 = vmatmul.mubr.f32.gmra.mrb[0].mxu0 %v297
        %v1112 = vpop.f32.mrb[0].mxu0
        %v1113 = vadd.f32 %v968, %v1112
        %v1114 = vpop.f32.mrb[0].mxu0
        %1115 = vmatprep.mubr.f32.mxu0 %v302
        %1116 = vmatmul.mubr.f32.gmra.mrb[0].mxu0 %v301
        %v1117 = vpop.f32.mrb[0].mxu0
        %v1118 = vadd.f32 %v973, %v1117
        %v1119 = vpop.f32.mrb[0].mxu0
        %1120 = vmatprep.mubr.f32.mxu0 %v306
        %1121 = vmatmul.mubr.f32.gmra.mrb[0].mxu0 %v305
        %v1122 = vpop.f32.mrb[0].mxu0
        %v1123 = vadd.f32 %v978, %v1122
        %v1124 = vpop.f32.mrb[0].mxu0
        %1125 = vmatprep.mubr.f32.mxu0 %v310
        %1126 = vmatmul.mubr.f32.gmra.mrb[0].mxu0 %v309
        %v1127 = vpop.f32.mrb[0].mxu0
        %v1128 = vadd.f32 %v983, %v1127
        %v1129 = vpop.f32.mrb[0].mxu0
        %1130 = vmatprep.mubr.f32.mxu0 %v314
        %1131 = vmatmul.mubr.f32.gmra.mrb[0].mxu0 %v313
        %v1132 = vpop.f32.mrb[0].mxu0
        %v1133 = vadd.f32 %v988, %v1132
        %v1134 = vpop.f32.mrb[0].mxu0
        %1135 = vdwg.mxu0
        %1136 = vst [vmem:[%s241] sm:$0xff] %v752
        %1137 = vst [vmem:[%s241 + $0x8] sm:$0xff] %v754
        %1138 = vst [vmem:[%s241 + $0x10] sm:$0xff] %v1058
        %1139 = vst [vmem:[%s241 + $0x18] sm:$0xff] %v758
        %1140 = vst [vmem:[%s241 + $0x20] sm:$0xff] %v760
        %1141 = vst [vmem:[%s241 + $0x28] sm:$0xff] %v1063
        %1142 = vst [vmem:[%s241 + $0x30] sm:$0xff] %v764
        %1143 = vst [vmem:[%s241 + $0x38] sm:$0xff] %v766
        %1144 = vst [vmem:[%s241 + $0x40] sm:$0xff] %v1068
        %1145 = vst [vmem:[%s241 + $0x48] sm:$0xff] %v770
        %1146 = vst [vmem:[%s241 + $0x50] sm:$0xff] %v772
        %1147 = vst [vmem:[%s241 + $0x58] sm:$0xff] %v1073
        %1148 = vst [vmem:[%s241 + $0x60] sm:$0xff] %v776
        %1149 = vst [vmem:[%s241 + $0x68] sm:$0xff] %v778
        %1150 = vst [vmem:[%s241 + $0x70] sm:$0xff] %v1078
        %1151 = vst [vmem:[%s241 + $0x78] sm:$0xff] %v782
        %1152 = vst [vmem:[%s241 + $0x80] sm:$0xff] %v784
        %1153 = vst [vmem:[%s241 + $0x88] sm:$0xff] %v1083
        %1154 = vst [vmem:[%s241 + $0x90] sm:$0xff] %v788
        %1155 = vst [vmem:[%s241 + $0x98] sm:$0xff] %v790
        %1156 = vst [vmem:[%s241 + $0xa0] sm:$0xff] %v1088
        %1157 = vst [vmem:[%s241 + $0xa8] sm:$0xff] %v794
        %1158 = vst [vmem:[%s241 + $0xb0] sm:$0xff] %v796
        %1159 = vst [vmem:[%s241 + $0xb8] sm:$0xff] %v1093
        %1160 = vst [vmem:[%s241 + $0xc0] sm:$0xff] %v800
        %1161 = vst [vmem:[%s241 + $0xc8] sm:$0xff] %v802
        %1162 = vst [vmem:[%s241 + $0xd0] sm:$0xff] %v1098
        %1163 = vst [vmem:[%s241 + $0xd8] sm:$0xff] %v806
        %1164 = vst [vmem:[%s241 + $0xe0] sm:$0xff] %v808
        %1165 = vst [vmem:[%s241 + $0xe8] sm:$0xff] %v1103
        %1166 = vst [vmem:[%s241 + $0xf0] sm:$0xff] %v812
        %1167 = vst [vmem:[%s241 + $0xf8] sm:$0xff] %v814
        %1168 = vst [vmem:[%s241 + $0x100] sm:$0xff] %v1108
        %1169 = vst [vmem:[%s241 + $0x108] sm:$0xff] %v818
        %1170 = vst [vmem:[%s241 + $0x110] sm:$0xff] %v820
        %1171 = vst [vmem:[%s241 + $0x118] sm:$0xff] %v1113
        %1172 = vst [vmem:[%s241 + $0x120] sm:$0xff] %v824
        %1173 = vst [vmem:[%s241 + $0x128] sm:$0xff] %v826
        %1174 = vst [vmem:[%s241 + $0x130] sm:$0xff] %v1118
        %1175 = vst [vmem:[%s241 + $0x138] sm:$0xff] %v830
        %1176 = vst [vmem:[%s241 + $0x140] sm:$0xff] %v832
        %1177 = vst [vmem:[%s241 + $0x148] sm:$0xff] %v1123
        %1178 = vst [vmem:[%s241 + $0x150] sm:$0xff] %v836
        %1179 = vst [vmem:[%s241 + $0x158] sm:$0xff] %v838
        %1180 = vst [vmem:[%s241 + $0x160] sm:$0xff] %v1128
        %1181 = vst [vmem:[%s241 + $0x168] sm:$0xff] %v842
        %1182 = vst [vmem:[%s241 + $0x170] sm:$0xff] %v844
        %1183 = vst [vmem:[%s241 + $0x178] sm:$0xff] %v1133
        %s1184 = sand.u32 %s121, 1
        %s1185 = scalar_lea.sflag [#allocation4], %s1184
        %s1186 = sand.u32 %s121, 1
        %s1187 = smul.addr %s1186, 384
        %s1188 = scalar_lea.vmem [#allocation7], %s1187
        // Predicated region
        $region41: #{bound_module_forward.1} parent=31 // pred_check
          %p1189 = pneg %p131
        $region42: #{bound_module_forward.1} parent=31 // pred_check_branch
          %1191 = sbr.rel (%p1189) target = $region44
        $region43: #{bound_module_forward.1} parent=31 // pred_region
          %s1192 = smul.u32 16, %s25
          %s1193 = smul.u32 3, %s26
          %s1195 = ssub.s32 6144, 6144
          %1196 = vsyncadd %s1185, %s1195
          %s1197 = smul.addr %s1192, 3
          %s1198 = sadd.s32 %s1193, %s1197
          %s1199 = smul.addr %s1198, 128
          %s1200 = scalar_lea.hbm %s3, %s1199
          %s1201 = sshll.u32 %s1188, 4
          %s1202 = int_to_ptr.vmem [resolvable:$true] %s1201
          %1207 = dma.vmem_to_hbm [thread:$0]  %s1202, 6144, %s1200, %s1185, 384, 384, 24
        $region44: #{bound_module_forward.1} parent=31 // pred_fallthru
          _
      $region32: #{bound_module_forward.1} parent=5 // pred_fallthru
        _
      %p1208 = scmp.le.s32.totalorder 2, %s16
      // Predicated region
      $region45: #{bound_module_forward.1} parent=5 // pred_check
        %p1209 = pneg %p1208
      $region46: #{bound_module_forward.1} parent=5 // pred_check_branch
        %1211 = sbr.rel (%p1209) target = $region48
      $region47: #{bound_module_forward.1} parent=5 // pred_region
        %s1212 = ssub.s32 %s16, 2
        // Predicated region
        $region49: #{bound_module_forward.1} parent=47 // pred_check
          %p1213 = pneg %p137
        $region50: #{bound_module_forward.1} parent=47 // pred_check_branch
          %1215 = sbr.rel (%p1213) target = $region52
        $region51: #{bound_module_forward.1} parent=47 // pred_region
          %s1216 = sand.u32 %s122, 1
          %s1217 = scalar_lea.sflag [#allocation4], %s1216
          %s1218 = sand.u32 %s122, 1
          %s1219 = smul.addr %s1218, 384
          %s1220 = scalar_lea.vmem [#allocation7], %s1219
          %1221 = dma.done %s1217, 6144
        $region52: #{bound_module_forward.1} parent=47 // pred_fallthru
          _
      $region48: #{bound_module_forward.1} parent=5 // pred_fallthru
        _
    $region6: #{bound_module_forward.1} parent=1 // loop_footer
      %s20 = sadd.s32 1, %s16
    $region7: #{bound_module_forward.1} parent=1 // loop_footer_branch
      %15 = sbr.rel target = $region3
    $region8: #{bound_module_forward.1} parent=1 // loop_exit
      _
    %1222 = vsyncpa [#allocation3], 1
    %s1223 = scalar_lea.sflag [#allocation3], 1
    %1224 = vsyncpa %s1223, 1
    %1225 = vsyncpa [#allocation6], 1
    %1226 = vsyncpa [#allocation4], 1
    %s1227 = scalar_lea.sflag [#allocation4], 1
    %1228 = vsyncpa %s1227, 1

</llo_original>
